<compile_context>
chip_gen: v5e
topology: v5e:2x2
jax: 0.10.0
libtpu: 0.0.40
codegen_flags: <defaults>
</compile_context>

<pallas_src>
import math

import jax
import jax.numpy as jnp
from jax.experimental import pallas as pl
from jax.experimental.pallas import tpu as pltpu


# --------------------------------------------------------------------------
# small helpers
# --------------------------------------------------------------------------
def _round_up(n, q):
    return ((n + q - 1) // q) * q


def _vmem_capacity_bytes():
    """Generation-aware VMEM capacity (64 MiB on v7x, 128 MiB on v5e/v6e)."""
    try:
        return int(pltpu.get_tpu_info().vmem_capacity_bytes)
    except Exception:
        return 64 * 1024 * 1024          # conservative fallback (v7x per-core VMEM)


def _pick_tile(n_pad, target):
    """Largest multiple of 128 that divides n_pad and is <= target (n_pad % 128 == 0)."""
    t = max(128, min((int(target) // 128) * 128, n_pad))
    while n_pad % t:
        t -= 128
    return t


def _choose_tiles(n_pad, tdst_target=None, tsrc_target=None):
    cap = _vmem_capacity_bytes()
    tdst = _pick_tile(n_pad, 512 if tdst_target is None else tdst_target)
    if tsrc_target is None:
        # target ~4 MiB per bf16 A^T buffer on 128 MiB parts, ~2 MiB on 64 MiB parts
        per_buf = (4 << 20) if cap >= (96 << 20) else (2 << 20)
        tsrc_target = max(128, per_buf // (2 * tdst))
    tsrc = _pick_tile(n_pad, tsrc_target)
    return tdst, tsrc, cap


def _vmem_budget(tsrc, tdst, cap):
    at_bufs = 2 * tsrc * tdst * 2          # double-buffered bf16 A^T blocks
    xw_bufs = 2 * 16 * tsrc * 2            # (1, tsrc) bf16 blocks (sublane-padded)
    out_bufs = 2 * 8 * tdst * 4            # (1, tdst) f32 resident score block
    total = at_bufs + xw_bufs + out_bufs + (2 << 20)    # + compiler temporaries
    return int(min(max(total, 8 << 20), cap * 3 // 4))


# --------------------------------------------------------------------------
# Kernel 1: GraphConv score  s = A_norm @ (x @ w) + b
#   grid = (dst blocks [parallel], src blocks [arbitrary]); bf16 MXU dot, f32 accumulate
#   into the resident lane-dense (1, tdst) output block.
# --------------------------------------------------------------------------
def _graphconv_score_kernel(xw_ref, at_ref, b_ref, score_ref):
    k = pl.program_id(1)

    @pl.when(k == 0)
    def _init():
        # initialize the resident accumulator with the GraphConv bias
        score_ref[...] = jnp.zeros(score_ref.shape, jnp.float32) + b_ref[0, 0]

    # (1, tsrc) bf16 @ (tsrc, tdst) bf16 -> (1, tdst) f32 on the MXU.  Natural K
    # contraction (lhs minor vs rhs major), no operand transpose, no f32 cast of A.
    score_ref[...] += jnp.dot(xw_ref[...], at_ref[...],
                              preferred_element_type=jnp.float32)


def graphconv_score(xw_pad_bf16, a_t_pad_bf16, b2, *, tdst=None, tsrc=None):
    n_pad = a_t_pad_bf16.shape[0]
    tdst_, tsrc_, cap = _choose_tiles(n_pad, tdst, tsrc)
    budget = _vmem_budget(tsrc_, tdst_, cap)
    return pl.pallas_call(
        _graphconv_score_kernel,
        out_shape=jax.ShapeDtypeStruct((1, n_pad), jnp.float32),
        grid=(n_pad // tdst_, n_pad // tsrc_),
        in_specs=[
            pl.BlockSpec((1, tsrc_), lambda i, k: (0, k)),       # xw row block (bf16)
            pl.BlockSpec((tsrc_, tdst_), lambda i, k: (k, i)),   # A^T block (bf16)
            pl.BlockSpec(memory_space=pltpu.MemorySpace.SMEM),   # bias scalar
        ],
        out_specs=pl.BlockSpec((1, tdst_), lambda i, k: (0, i)), # lane-dense resident acc
        compiler_params=pltpu.CompilerParams(
            dimension_semantics=("parallel", "arbitrary"),       # dst sharded, src reduced
            vmem_limit_bytes=budget),
    )(xw_pad_bf16, a_t_pad_bf16, b2)


# --------------------------------------------------------------------------
# Kernel 2: softmax over the valid N entries of the (1, N_pad) score slab (two-phase
# softmax done in one pass since the slab is tiny) + tanh(score) as a free second output.
# TODO(synk): for N_pad beyond ~1M nodes this single-block kernel would need tiling +
# a two-pass reduction; not needed at these graph sizes.
# --------------------------------------------------------------------------
def _softmax_tanh_kernel(score_ref, n_ref, soft_ref, tanh_ref):
    s = score_ref[...]                                                    # (1, n_pad) f32
    valid = jax.lax.broadcasted_iota(jnp.int32, s.shape, 1) < n_ref[0, 0]
    s_m = jnp.where(valid, s, -jnp.inf)
    m = jnp.max(s_m, axis=1, keepdims=True)
    e = jnp.where(valid, jnp.exp(s_m - m), 0.0)
    inv = 1.0 / jnp.sum(e, axis=1, keepdims=True)   # one scalar divide + N multiplies
    soft_ref[...] = e * inv
    tanh_ref[...] = jnp.tanh(s)                     # EUP; padded cols sliced off by caller


def softmax_tanh(score_pad, n_valid):
    n_pad = score_pad.shape[1]
    n_arr = jnp.full((1, 1), n_valid, jnp.int32)
    return pl.pallas_call(
        _softmax_tanh_kernel,
        out_shape=(jax.ShapeDtypeStruct((1, n_pad), jnp.float32),   # softmax(score)
                   jax.ShapeDtypeStruct((1, n_pad), jnp.float32)),  # tanh(score)
        grid=(1,),
        in_specs=[pl.BlockSpec((1, n_pad), lambda i: (0, 0)),
                  pl.BlockSpec(memory_space=pltpu.MemorySpace.SMEM)],
        out_specs=(pl.BlockSpec((1, n_pad), lambda i: (0, 0)),
                   pl.BlockSpec((1, n_pad), lambda i: (0, 0))),
    )(score_pad, n_arr)


# --------------------------------------------------------------------------
# Graph preprocessing (cached): A^T in bf16, zero-padded to a multiple of 128.
# Done once per (batched) graph and reused across layers / forward passes so the
# transpose+cast N^2 pass is not paid inside the forward.
# --------------------------------------------------------------------------
def preprocess_adjacency(a_norm):
    n = a_norm.shape[0]
    n_pad = _round_up(n, 128)
    a_t = jnp.asarray(a_norm, jnp.float32).T.astype(jnp.bfloat16)
    return jnp.zeros((n_pad, n_pad), jnp.bfloat16).at[:n, :n].set(a_t)


# --------------------------------------------------------------------------
# Glue: approximate mytopk + mask/nonzero (host-side, no clean Pallas form)
# --------------------------------------------------------------------------
def mytopk_approx(score_1d, smallratio, ratio, batch_num_nodes):
    # TODO(synk): exact `mytopk` semantics (smallratio handling) live in the source repo
    # only; per-graph top-ceil(ratio * n) selection is used here.
    perms, ks = [], []
    offset = 0
    for n in batch_num_nodes:
        k = max(1, int(math.ceil(ratio * n)))
        seg = score_1d[offset:offset + n]
        idx = jnp.argsort(-seg)[:k].astype(jnp.int32) + offset
        perms.append(idx)
        ks.append(k)
        offset += n
    return jnp.concatenate(perms), jnp.array(ks, dtype=jnp.int32)


# --------------------------------------------------------------------------
# COMSAGPool_b forward
# --------------------------------------------------------------------------
def comsagpool_b_forward(a_t_pad_bf16, feature, w, b, batch_num_nodes,
                         ratio=0.5, smallratio=0.25, tdst=None, tsrc=None):
    N, F = feature.shape
    n_pad = a_t_pad_bf16.shape[0]

    # xw = x @ w hoisted out of the hot kernel (tiny [N,F]x[F,1] matvec done by XLA),
    # stored lane-dense in bf16 (the MXU operand dtype), zero-padded on the source axis.
    xw = jnp.dot(feature, w).reshape(1, N).astype(jnp.bfloat16)
    xw_pad = jnp.zeros((1, n_pad), jnp.bfloat16).at[:, :N].set(xw)
    b2 = jnp.asarray(b, jnp.float32).reshape(1, 1)

    score_pad = graphconv_score(xw_pad, a_t_pad_bf16, b2, tdst=tdst, tsrc=tsrc)
    soft_pad, tanh_pad = softmax_tanh(score_pad, N)

    score = score_pad[0, :N]
    score_soft = soft_pad[0, :N]
    tanh_s = tanh_pad[0, :N]

    perm, k = mytopk_approx(score, smallratio, ratio, batch_num_nodes)
    K = int(perm.shape[0])
    mask = jnp.ones((N,), jnp.float32).at[perm].set(0.0)
    perm_com = jnp.nonzero(mask, size=N - K)[0].astype(jnp.int32)

    # Data-dependent row gather + broadcast multiply left to XLA (it fuses with the take;
    # a dedicated Pallas pass would move exactly the same HBM bytes, one launch more).
    feature_dis = jnp.take(feature, perm, axis=0) * jnp.take(tanh_s, perm)[:, None]
    feature_com = jnp.take(feature, perm_com, axis=0) * jnp.take(tanh_s, perm_com)[:, None]

    k_com = jnp.asarray(batch_num_nodes, jnp.int32) - k

    # TODO(synk): dgl.node_subgraph / set_batch_num_nodes are graph-structure ops with no
    # Pallas equivalent; node index sets (perm, perm_com) and per-graph counts are returned.
    e_feat = None
    return feature_dis, feature_com, perm, perm_com, score_soft, k, k_com, e_feat


# --------------------------------------------------------------------------
# Main: deterministic small example (2 graphs x 120 nodes, F=32 -> exercises padding
# to 256 and the 2x2 [parallel dst, arbitrary src] grid)
# --------------------------------------------------------------------------
def build_normalized_adjacency(key, batch_num_nodes, p=0.05):
    """Block-diagonal random adjacency; A[dst, src] = 1 for a message src -> dst,
    normalized as D_in^{-1/2} A D_out^{-1/2} (DGL GraphConv, norm='both')."""
    N = int(sum(batch_num_nodes))
    A = jnp.zeros((N, N), jnp.float32)
    off = 0
    for gi, n in enumerate(batch_num_nodes):
        sub = jax.random.bernoulli(jax.random.fold_in(key, gi), p, (n, n)).astype(jnp.float32)
        A = A.at[off:off + n, off:off + n].set(sub)
        off += n
    deg_in = A.sum(axis=1)
    deg_out = A.sum(axis=0)
    di = jnp.where(deg_in > 0, 1.0 / jnp.sqrt(deg_in), 0.0)
    do = jnp.where(deg_out > 0, 1.0 / jnp.sqrt(deg_out), 0.0)
    return di[:, None] * A * do[None, :]


if __name__ == "__main__":
    batch_num_nodes = [120, 120]     # N = 240 -> padded to 256
    N = sum(batch_num_nodes)
    F = 32                           # in_dim
    ratio, smallratio = 0.5, 0.25

    key = jax.random.PRNGKey(0)
    kx, kw, ka = jax.random.split(key, 3)
    feature = jax.random.normal(kx, (N, F), dtype=jnp.float32)
    w = 0.1 * jax.random.normal(kw, (F, 1), dtype=jnp.float32)
    b = jnp.zeros((1, 1), jnp.float32)
    a_norm = build_normalized_adjacency(ka, batch_num_nodes, p=0.05)

    a_t_pad = preprocess_adjacency(a_norm)   # cached graph preprocessing (one-time)

    # small tiles so the test exercises multi-block accumulation + the parallel dst axis
    outs = comsagpool_b_forward(a_t_pad, feature, w, b, batch_num_nodes,
                                ratio=ratio, smallratio=smallratio,
                                tdst=128, tsrc=128)
    feature_dis, feature_com, perm, perm_com, score_soft, k, k_com, e_feat = outs
    jax.block_until_ready((feature_dis, feature_com, score_soft))

    # --- correctness check against plain-JAX reference (same bf16-rounded operands) ---
    a_used = a_norm.astype(jnp.bfloat16).astype(jnp.float32)
    xw_used = jnp.dot(feature, w).reshape(-1).astype(jnp.bfloat16).astype(jnp.float32)
    score_ref = jnp.sum(a_used * xw_used[None, :], axis=1) + b[0, 0]
    soft_ref = jax.nn.softmax(score_ref, axis=0)
    fdis_ref = feature[perm] * jnp.tanh(score_ref[perm])[:, None]
    fcom_ref = feature[perm_com] * jnp.tanh(score_ref[perm_com])[:, None]

    assert bool(jnp.allclose(score_soft, soft_ref, atol=1e-4))
    assert bool(jnp.allclose(feature_dis, fdis_ref, atol=1e-4))
    assert bool(jnp.allclose(feature_com, fcom_ref, atol=1e-4))
    # NaN guard mirroring the module's isnan check on softmax(score)
    assert not bool(jnp.any(jnp.isnan(score_soft)))
    assert int(k.sum()) == int(perm.shape[0]) and int(k_com.sum()) == int(perm_com.shape[0])

    print("KERNEL_OK")
</pallas_src>

<mosaic_0001>
module attributes {stable_mosaic.version = 11 : i64} {
  func.func @_graphconv_score_kernel(%arg0: i32, %arg1: i32, %arg2: memref<1x128xbf16, #tpu.memory_space<vmem>>, %arg3: memref<128x128xbf16, #tpu.memory_space<vmem>>, %arg4: memref<1x1xf32, #tpu.memory_space<smem>>, %arg5: memref<1x128xf32, #tpu.memory_space<vmem>>) attributes {dimension_semantics = [#tpu.dimension_semantics<parallel>, #tpu.dimension_semantics<arbitrary>], iteration_bounds = array<i64: 2, 2>, scalar_prefetch = 0 : i64, scratch_operands = 0 : i64, tpu.core_type = #tpu.core_type<tc>, window_params = [{transform_indices = @transform_0, window_bounds = array<i64: 1, 128>}, {transform_indices = @transform_1, window_bounds = array<i64: 128, 128>}, {transform_indices = @transform_2, window_bounds = array<i64: 1, 1>}, {transform_indices = @transform_3, window_bounds = array<i64: 1, 128>}]} {
    %c0_i32 = arith.constant 0 : i32
    %0 = arith.cmpi eq, %arg1, %c0_i32 : i32
    %1 = arith.extui %0 : i1 to i32
    %c0_i32_0 = arith.constant 0 : i32
    %2 = arith.cmpi ne, %1, %c0_i32_0 : i32
    scf.if %2 {
      %cst_8 = arith.constant 0.000000e+00 : f32
      %9 = vector.broadcast %cst_8 : f32 to vector<1x128xf32>
      %c0_9 = arith.constant 0 : index
      %c0_10 = arith.constant 0 : index
      %10 = memref.load %arg4[%c0_9, %c0_10] : memref<1x1xf32, #tpu.memory_space<smem>>
      %11 = vector.broadcast %10 : f32 to vector<1x128xf32>
      %12 = arith.addf %9, %11 : vector<1x128xf32>
      %c0_11 = arith.constant 0 : index
      %c0_12 = arith.constant 0 : index
      %13 = vector.load %arg5[%c0_11, %c0_12] : memref<1x128xf32, #tpu.memory_space<vmem>>, vector<1x128xf32>
      tpu.vector_store %arg5[%c0_11, %c0_12], %12 {strides = array<i32>} : memref<1x128xf32, #tpu.memory_space<vmem>>, vector<1x128xf32>,
    } else {
    }
    %c0 = arith.constant 0 : index
    %c0_1 = arith.constant 0 : index
    %3 = vector.load %arg5[%c0, %c0_1] : memref<1x128xf32, #tpu.memory_space<vmem>>, vector<1x128xf32>
    %c0_2 = arith.constant 0 : index
    %c0_3 = arith.constant 0 : index
    %4 = vector.load %arg2[%c0_2, %c0_3] : memref<1x128xbf16, #tpu.memory_space<vmem>>, vector<1x128xbf16>
    %c0_4 = arith.constant 0 : index
    %c0_5 = arith.constant 0 : index
    %5 = vector.load %arg3[%c0_4, %c0_5] : memref<128x128xbf16, #tpu.memory_space<vmem>>, vector<128x128xbf16>
    %cst = arith.constant dense<0.000000e+00> : vector<1x128xf32>
    %6 = tpu.matmul %4, %5, %cst {dimension_numbers = #tpu.dot_dimension_numbers<[1], [0], [0], [1], [0, 0, 1, 1], [], []>} : vector<1x128xbf16>, vector<128x128xbf16>, vector<1x128xf32> -> vector<1x128xf32>
    %7 = arith.addf %3, %6 : vector<1x128xf32>
    %c0_6 = arith.constant 0 : index
    %c0_7 = arith.constant 0 : index
    %8 = vector.load %arg5[%c0_6, %c0_7] : memref<1x128xf32, #tpu.memory_space<vmem>>, vector<1x128xf32>
    tpu.vector_store %arg5[%c0_6, %c0_7], %7 {strides = array<i32>} : memref<1x128xf32, #tpu.memory_space<vmem>>, vector<1x128xf32>,
    return
  }
  func.func @transform_0(%arg0: i32, %arg1: i32) -> (i32, i32) {
    %c0_i32 = arith.constant 0 : i32
    %c0_i32_0 = arith.constant 0 : i32
    return %c0_i32, %arg1 : i32, i32
  }
  func.func @transform_1(%arg0: i32, %arg1: i32) -> (i32, i32) {
    %c0_i32 = arith.constant 0 : i32
    return %arg1, %arg0 : i32, i32
  }
  func.func @transform_2(%arg0: i32, %arg1: i32) -> (i32, i32) {
    %c0_i32 = arith.constant 0 : i32
    %c0_i32_0 = arith.constant 0 : i32
    %c0_i32_1 = arith.constant 0 : i32
    return %c0_i32, %c0_i32_0 : i32, i32
  }
  func.func @transform_3(%arg0: i32, %arg1: i32) -> (i32, i32) {
    %c0_i32 = arith.constant 0 : i32
    %c0_i32_0 = arith.constant 0 : i32
    return %c0_i32, %arg0 : i32, i32
  }
}

</mosaic_0001>

<llo_original>
// kernel: tpu_custom_call.1
$region0: #{tpu_custom_call.1}
  #allocation0 [shape = 'u32[]', space=smem, size = 0x4, offset = 0x4, fixed_abs, tag = 'smem constant byte address 0x4 - core index']
  #allocation1 [shape = 'u32[72,128]{1,0:T(1,128)}', space=vmem, size = 0x9000, scoped, tag = 'internal scratch']
  #allocation2 [shape = 'f32[1,1]{1,0:T(1,128)S(6)}', space=smem, size = 0x200, scoped, tag = 'scoped memory for tpu_custom_call.1']
  %s0 = inlined_call_operand.vmem [shape: bf16[1,256], index: 0, kind: input, shape index: {}]
  %s1 = inlined_call_operand.hbm [shape: bf16[256,256], index: 1, kind: input, shape index: {}]
  %s2 = inlined_call_operand.<no memory space> [shape: f32[1,1], index: 2, kind: input, shape index: {}]
  %s3 = inlined_call_operand.hbm [shape: f32[1,256], index: 3, kind: output, shape index: {}]
  %s4 = sld [smem:[#allocation0]]
  $region53: #{tpu_custom_call.1} parent=0
    _
  %s6 = ssub.s32 1, %s4
  %s7 = scalar_select 0, %s6, %s4
  %8 = sst [smem:[#allocation2]] %s2
  $region1: #{tpu_custom_call.1} parent=0
    #allocation3 [shape = 'u8[65536]{0}', space=vmem, size = 0x10000, scoped, tag = 'input window, operand 1']
    #allocation4 [shape = 's32[2]{0}', space=sflag, size = 0x8, scoped, tag = 'scoped memory for tpu_custom_call.1']
    #allocation5 [shape = 's32[2]{0}', space=sflag, size = 0x8, scoped, tag = 'scoped memory for tpu_custom_call.1']
    #allocation6 [shape = 'u8[1024]{0}', space=vmem, size = 0x400, scoped, tag = 'output window, operand 0']
    %9 = vsyncpa [#allocation4], 0
    %s10 = scalar_lea.sflag [#allocation4], 1
    %11 = vsyncpa %s10, 0
    %12 = vsyncpa [#allocation5], 0
    %s13 = scalar_lea.sflag [#allocation5], 1
    %14 = vsyncpa %s13, 0
    loop: start=0, step=1, limit=6
    $region2: #{tpu_custom_call.1} parent=1 // loop_pre_header
      _
    $region3: #{tpu_custom_call.1} parent=1 // loop_header
      %s16 = sphi 0, %s20
      %p17 = scmp.ge.s32.totalorder %s16, 6
      %s23 = sphi 0, %s35
      %s24 = sphi 0, %s31
      %s25 = sphi 0, %s23
      %s26 = sphi 0, %s24
      %s27 = sphi 0, %s25
      %s28 = sphi 0, %s26
      %s38 = sphi 0, %s40
      %s41 = sphi 0, %s38
      %s42 = sphi 0, %s41
      %s58 = sphi 0, %s42
      %s66 = sphi 0, %s68
      %s69 = sphi 0, %s66
      %s70 = sphi 0, %s69
      %s86 = sphi 0, %s70
      %s90 = sphi 0, %s90
      %s92 = sphi 0, %s90
      %s93 = sphi 0, %s92
      %s107 = sphi 0, %s93
      %s113 = sphi 0, %s115
      %s116 = sphi 0, %s113
      %s117 = sphi 0, %s116
      %s133 = sphi 0, %s117
    $region4: #{tpu_custom_call.1} parent=1 // loop_header_branch
      %19 = sbr.rel (%p17) target = $region8
    $region5: #{tpu_custom_call.1} parent=1 // loop_body
      %s21 = ssub.s32 %s16, 1
      %s22 = ssub.s32 %s16, 2
      %s29 = sadd.s32 1, %s24
      %p30 = scmp.ge.s32.totalorder %s29, 2
      %s31 = scalar_select %p30, 0, %s29
      %s32 = sadd.s32 1, %s23
      %s33 = scalar_select %p30, %s32, %s23
      %p34 = scmp.ge.s32.totalorder %s33, 2
      %s35 = scalar_select %p34, 0, %s33
      %s36 = ssub.s32 %s24, %s31
      %p37 = scmp.eq.s32.totalorder %s36, 0
      %s39 = sadd.s32 %s38, 1
      %s40 = scalar_select %p37, %s38, %s39
      %p43 = pneg %p37
      %p44 = scmp.eq.s32.totalorder %s16, 3
      %p45 = por %p43, %p44
      %p46 = scmp.ne.s32.totalorder %s38, %s41
      %p47 = scmp.eq.s32.totalorder %s16, 0
      %p48 = por %p46, %p47
      %p49 = scmp.ne.s32.totalorder %s38, %s41
      %p50 = scmp.eq.s32.totalorder %s21, 3
      %p51 = por %p49, %p50
      %p52 = scmp.ne.s32.totalorder %s41, %s42
      %p53 = scmp.eq.s32.totalorder %s21, 0
      %p54 = por %p52, %p53
      %p55 = scmp.ne.s32.totalorder %s41, %s42
      %p56 = scmp.eq.s32.totalorder %s22, 3
      %p57 = por %p55, %p56
      %p59 = scmp.ne.s32.totalorder %s42, %s58
      %p60 = scmp.eq.s32.totalorder %s22, 0
      %p61 = por %p59, %p60
      %s62 = ssub.s32 %s24, %s31
      %s63 = ssub.s32 %s23, %s35
      %s64 = sor.u32 %s62, %s63
      %p65 = scmp.eq.s32.totalorder %s64, 0
      %s67 = sadd.s32 %s66, 1
      %s68 = scalar_select %p65, %s66, %s67
      %p71 = pneg %p65
      %p72 = scmp.eq.s32.totalorder %s16, 3
      %p73 = por %p71, %p72
      %p74 = scmp.ne.s32.totalorder %s66, %s69
      %p75 = scmp.eq.s32.totalorder %s16, 0
      %p76 = por %p74, %p75
      %p77 = scmp.ne.s32.totalorder %s66, %s69
      %p78 = scmp.eq.s32.totalorder %s21, 3
      %p79 = por %p77, %p78
      %p80 = scmp.ne.s32.totalorder %s69, %s70
      %p81 = scmp.eq.s32.totalorder %s21, 0
      %p82 = por %p80, %p81
      %p83 = scmp.ne.s32.totalorder %s69, %s70
      %p84 = scmp.eq.s32.totalorder %s22, 3
      %p85 = por %p83, %p84
      %p87 = scmp.ne.s32.totalorder %s70, %s86
      %p88 = scmp.eq.s32.totalorder %s22, 0
      %p89 = por %p87, %p88
      %s91 = sadd.s32 %s90, 1
      %p94 = scmp.eq.s32.totalorder %s16, 3
      %p95 = scmp.ne.s32.totalorder %s90, %s92
      %p96 = scmp.eq.s32.totalorder %s16, 0
      %p97 = por %p95, %p96
      %p98 = scmp.ne.s32.totalorder %s90, %s92
      %p99 = scmp.eq.s32.totalorder %s21, 3
      %p100 = por %p98, %p99
      %p101 = scmp.ne.s32.totalorder %s92, %s93
      %p102 = scmp.eq.s32.totalorder %s21, 0
      %p103 = por %p101, %p102
      %p104 = scmp.ne.s32.totalorder %s92, %s93
      %p105 = scmp.eq.s32.totalorder %s22, 3
      %p106 = por %p104, %p105
      %p108 = scmp.ne.s32.totalorder %s93, %s107
      %p109 = scmp.eq.s32.totalorder %s22, 0
      %p110 = por %p108, %p109
      %s111 = ssub.s32 %s23, %s35
      %p112 = scmp.eq.s32.totalorder %s111, 0
      %s114 = sadd.s32 %s113, 1
      %s115 = scalar_select %p112, %s113, %s114
      %p118 = pneg %p112
      %p119 = scmp.eq.s32.totalorder %s16, 3
      %p120 = por %p118, %p119
      %p121 = scmp.ne.s32.totalorder %s113, %s116
      %p122 = scmp.eq.s32.totalorder %s16, 0
      %p123 = por %p121, %p122
      %p124 = scmp.ne.s32.totalorder %s113, %s116
      %p125 = scmp.eq.s32.totalorder %s21, 3
      %p126 = por %p124, %p125
      %p127 = scmp.ne.s32.totalorder %s116, %s117
      %p128 = scmp.eq.s32.totalorder %s21, 0
      %p129 = por %p127, %p128
      %p130 = scmp.ne.s32.totalorder %s116, %s117
      %p131 = scmp.eq.s32.totalorder %s22, 3
      %p132 = por %p130, %p131
      %p134 = scmp.ne.s32.totalorder %s117, %s133
      %p135 = scmp.eq.s32.totalorder %s22, 0
      %p136 = por %p134, %p135
      %p137 = scmp.le.s32.totalorder 1, %s16
      %p138 = scmp.lt.s32.totalorder %s16, 5
      %p139 = pnand %p137, %p138
      %p140 = pneg %p139
      // Predicated region
      $region9: #{tpu_custom_call.1} parent=5 // pred_check
        _
      $region10: #{tpu_custom_call.1} parent=5 // pred_check_branch
        %142 = sbr.rel (%p139) target = $region12
      $region11: #{tpu_custom_call.1} parent=5 // pred_region
        %s143 = ssub.s32 %s16, 1
        // Predicated region
        $region13: #{tpu_custom_call.1} parent=11 // pred_check
          %p144 = pneg %p103
        $region14: #{tpu_custom_call.1} parent=11 // pred_check_branch
          %146 = sbr.rel (%p144) target = $region16
        $region15: #{tpu_custom_call.1} parent=11 // pred_region
          _
        $region16: #{tpu_custom_call.1} parent=11 // pred_fallthru
          _
      $region12: #{tpu_custom_call.1} parent=5 // pred_fallthru
        _
      %p147 = scmp.lt.s32.totalorder %s16, 4
      // Predicated region
      $region17: #{tpu_custom_call.1} parent=5 // pred_check
        %p148 = pneg %p147
      $region18: #{tpu_custom_call.1} parent=5 // pred_check_branch
        %150 = sbr.rel (%p148) target = $region20
      $region19: #{tpu_custom_call.1} parent=5 // pred_region
        // Predicated region
        $region21: #{tpu_custom_call.1} parent=19 // pred_check
          %p151 = pneg %p48
        $region22: #{tpu_custom_call.1} parent=19 // pred_check_branch
          %153 = sbr.rel (%p151) target = $region24
        $region23: #{tpu_custom_call.1} parent=19 // pred_region
          %p154 = scmp.lt.s32.totalorder %s24, 1
          %s155 = scalar_select %p154, %s24, 1
          %s156 = scalar_lea.vmem %s0, %s155
        $region24: #{tpu_custom_call.1} parent=19 // pred_fallthru
          _
        // Predicated region
        $region25: #{tpu_custom_call.1} parent=19 // pred_check
          %p157 = pneg %p76
        $region26: #{tpu_custom_call.1} parent=19 // pred_check_branch
          %159 = sbr.rel (%p157) target = $region28
        $region27: #{tpu_custom_call.1} parent=19 // pred_region
          %s160 = sand.u32 %s66, 1
          %s161 = scalar_lea.sflag [#allocation4], %s160
          %s162 = sand.u32 %s66, 1
          %s163 = smul.addr %s162, 64
          %s164 = scalar_lea.vmem [#allocation3], %s163
          %s165 = smul.u32 16, %s24
          %167 = vsyncadd %s161, 0
          %s168 = smul.addr %s165, 2
          %s169 = sadd.s32 %s23, %s168
          %s170 = smul.addr %s169, 4
          %s171 = scalar_lea.hbm %s1, %s170
          %s172 = sshll.u32 %s171, 4
          %s173 = int_to_ptr.hbm [resolvable:$true] %s172
          %s174 = sshll.u32 %s164, 4
          %s175 = int_to_ptr.vmem [resolvable:$true] %s174
          %180 = dma.hbm_to_vmem [thread:$0]  %s173, 1024, %s175, %s161, 128, 64, 4
        $region28: #{tpu_custom_call.1} parent=19 // pred_fallthru
          _
      $region20: #{tpu_custom_call.1} parent=5 // pred_fallthru
        _
      %p181 = scmp.le.s32.totalorder 1, %s16
      %p182 = scmp.lt.s32.totalorder %s16, 5
      %p183 = pnand %p181, %p182
      %p184 = pneg %p183
      // Predicated region
      $region29: #{tpu_custom_call.1} parent=5 // pred_check
        _
      $region30: #{tpu_custom_call.1} parent=5 // pred_check_branch
        %186 = sbr.rel (%p183) target = $region32
      $region31: #{tpu_custom_call.1} parent=5 // pred_region
        %s187 = ssub.s32 %s16, 1
        %s188 = sand.u32 %s69, 1
        %s189 = scalar_lea.sflag [#allocation4], %s188
        %s190 = sand.u32 %s69, 1
        %s191 = smul.addr %s190, 64
        %s192 = scalar_lea.vmem [#allocation3], %s191
        // Predicated region
        $region33: #{tpu_custom_call.1} parent=31 // pred_check
          %p193 = pneg %p82
        $region34: #{tpu_custom_call.1} parent=31 // pred_check_branch
          %195 = sbr.rel (%p193) target = $region36
        $region35: #{tpu_custom_call.1} parent=31 // pred_region
          %197 = dma.done %s189, 1024
        $region36: #{tpu_custom_call.1} parent=31 // pred_fallthru
          _
        %p198 = scmp.lt.s32.totalorder %s26, 1
        %s199 = scalar_select %p198, %s26, 1
        %s200 = scalar_lea.vmem %s0, %s199
        %p201 = pneg %p54
        %p202 = pneg %p51
        %s203 = sand.u32 %s69, 1
        %s204 = scalar_lea.sflag [#allocation4], %s203
        %s205 = sand.u32 %s69, 1
        %s206 = smul.addr %s205, 64
        %s207 = scalar_lea.vmem [#allocation3], %s206
        %p208 = pneg %p82
        %p209 = pneg %p79
        %p210 = pneg %p103
        %p211 = pneg %p100
        %p212 = pneg %p129
        %p213 = pneg %p126
        %s214 = sand.u32 %s116, 1
        %s215 = scalar_lea.sflag [#allocation5], %s214
        %s216 = sand.u32 %s116, 1
        %s217 = scalar_lea.vmem [#allocation6], %s216
        %p218 = scmp.lt.s32.totalorder %s26, 1
        %s219 = scalar_select %p218, %s26, 1
        %s220 = scalar_lea.vmem %s0, %s219
        %s221 = smul.u32 16, %s26
        %p222 = scmp.eq.s32.totalorder %s26, 0
        // Predicated region
        $region37: #{tpu_custom_call.1} parent=31 // pred_check
          %p223 = pneg %p222
        $region38: #{tpu_custom_call.1} parent=31 // pred_check_branch
          %225 = sbr.rel (%p223) target = $region40
        $region39: #{tpu_custom_call.1} parent=31 // pred_region
          %s226 = sld [smem:[#allocation2]]
          %v227 = vstv %s226
          %v228 = vadd.f32 %v227, 0.0
          %229 = vst [vmem:[%s217] sm:$0x1] %v228
        $region40: #{tpu_custom_call.1} parent=31 // pred_fallthru
          _
        %v230 = vld [vmem:[%s217] sm:$0x1]
        %v231 = vld [vmem:[%s220] sm:$0x1]
        %v232 = vld [vmem:[%s192] sm:$0xf]
        %v233 = vld [vmem:[%s192 + $0x4] sm:$0xf]
        %v234 = vld [vmem:[%s192 + $0x8] sm:$0xf]
        %v235 = vld [vmem:[%s192 + $0xc] sm:$0xf]
        %v236 = vld [vmem:[%s192 + $0x10] sm:$0xf]
        %v237 = vld [vmem:[%s192 + $0x14] sm:$0xf]
        %v238 = vld [vmem:[%s192 + $0x18] sm:$0xf]
        %v239 = vld [vmem:[%s192 + $0x1c] sm:$0xf]
        %v240 = vld [vmem:[%s192 + $0x20] sm:$0xf]
        %v241 = vld [vmem:[%s192 + $0x24] sm:$0xf]
        %v242 = vld [vmem:[%s192 + $0x28] sm:$0xf]
        %v243 = vld [vmem:[%s192 + $0x2c] sm:$0xf]
        %v244 = vld [vmem:[%s192 + $0x30] sm:$0xf]
        %v245 = vld [vmem:[%s192 + $0x34] sm:$0xf]
        %v246 = vld [vmem:[%s192 + $0x38] sm:$0xf]
        %v247 = vld [vmem:[%s192 + $0x3c] sm:$0xf]
        %v264 = vunpack.c.l.b16 %v232
        %v265 = vunpack.c.l.b16 %v233
        %v266 = vunpack.c.l.b16 %v234
        %v267 = vunpack.c.l.b16 %v235
        %v268 = vunpack.c.l.b16 %v236
        %v269 = vunpack.c.l.b16 %v237
        %v270 = vunpack.c.l.b16 %v238
        %v271 = vunpack.c.l.b16 %v239
        %v272 = vunpack.c.l.b16 %v240
        %v273 = vunpack.c.l.b16 %v241
        %v274 = vunpack.c.l.b16 %v242
        %v275 = vunpack.c.l.b16 %v243
        %v276 = vunpack.c.l.b16 %v244
        %v277 = vunpack.c.l.b16 %v245
        %v278 = vunpack.c.l.b16 %v246
        %v279 = vunpack.c.l.b16 %v247
        %v280 = vpack.c.b16 %v265, %v264
        %v281 = vpack.c.b16 %v267, %v266
        %v282 = vpack.c.b16 %v269, %v268
        %v283 = vpack.c.b16 %v271, %v270
        %v284 = vpack.c.b16 %v273, %v272
        %v285 = vpack.c.b16 %v275, %v274
        %v286 = vpack.c.b16 %v277, %v276
        %v287 = vpack.c.b16 %v279, %v278
        %296 = vmatpush.bf16.msra.mxu0 %v287
        %297 = vmatpush.bf16.msra.mxu0 %v286
        %298 = vmatpush.bf16.msra.mxu0 %v285
        %299 = vmatpush.bf16.msra.mxu0 %v284
        %300 = vmatpush.bf16.msra.mxu0 %v283
        %301 = vmatpush.bf16.msra.mxu0 %v282
        %302 = vmatpush.bf16.msra.mxu0 %v281
        %303 = vmatpush.bf16.msra.mxu0 %v280
        %304 = vmatmul.bf16.gmra.mxu0 %v231
        %v305 = vpop.f32.mrf.mxu0
        %v306 = vadd.f32 0.0, %v305
        %v307 = vpop.f32.mrf.mxu0
        %308 = vdwg.mxu0
        %v309 = vadd.f32 %v230, %v306
        %310 = vst [vmem:[%s217] sm:$0x1] %v309
        %s311 = sand.u32 %s116, 1
        %s312 = scalar_lea.sflag [#allocation5], %s311
        %s313 = sand.u32 %s116, 1
        %s314 = scalar_lea.vmem [#allocation6], %s313
        // Predicated region
        $region41: #{tpu_custom_call.1} parent=31 // pred_check
          %p315 = pneg %p126
        $region42: #{tpu_custom_call.1} parent=31 // pred_check_branch
          %317 = sbr.rel (%p315) target = $region44
        $region43: #{tpu_custom_call.1} parent=31 // pred_region
          %319 = vsyncadd %s312, 0
          %s320 = scalar_lea.hbm %s3, %s25
          %s322 = sshll.u32 %s314, 4
          %s323 = int_to_ptr.vmem [resolvable:$true] %s322
          %s324 = sshll.u32 %s320, 4
          %s325 = int_to_ptr.hbm [resolvable:$true] %s324
          %327 = dma.vmem_to_hbm [thread:$0]  %s323, 16, %s325, %s312
        $region44: #{tpu_custom_call.1} parent=31 // pred_fallthru
          _
      $region32: #{tpu_custom_call.1} parent=5 // pred_fallthru
        _
      %p328 = scmp.le.s32.totalorder 2, %s16
      // Predicated region
      $region45: #{tpu_custom_call.1} parent=5 // pred_check
        %p329 = pneg %p328
      $region46: #{tpu_custom_call.1} parent=5 // pred_check_branch
        %331 = sbr.rel (%p329) target = $region48
      $region47: #{tpu_custom_call.1} parent=5 // pred_region
        %s332 = ssub.s32 %s16, 2
        // Predicated region
        $region49: #{tpu_custom_call.1} parent=47 // pred_check
          %p333 = pneg %p132
        $region50: #{tpu_custom_call.1} parent=47 // pred_check_branch
          %335 = sbr.rel (%p333) target = $region52
        $region51: #{tpu_custom_call.1} parent=47 // pred_region
          %s336 = sand.u32 %s117, 1
          %s337 = scalar_lea.sflag [#allocation5], %s336
          %s338 = sand.u32 %s117, 1
          %s339 = scalar_lea.vmem [#allocation6], %s338
          %341 = dma.done %s337, 16
        $region52: #{tpu_custom_call.1} parent=47 // pred_fallthru
          _
      $region48: #{tpu_custom_call.1} parent=5 // pred_fallthru
        _
    $region6: #{tpu_custom_call.1} parent=1 // loop_footer
      %s20 = sadd.s32 1, %s16
    $region7: #{tpu_custom_call.1} parent=1 // loop_footer_branch
      %15 = sbr.rel target = $region3
    $region8: #{tpu_custom_call.1} parent=1 // loop_exit
      _
    %342 = vsyncpa [#allocation4], 1
    %s343 = scalar_lea.sflag [#allocation4], 1
    %344 = vsyncpa %s343, 1
    %345 = vsyncpa [#allocation5], 1
    %s346 = scalar_lea.sflag [#allocation5], 1
    %347 = vsyncpa %s346, 1

</llo_original>
